<compile_context>
chip_gen: v7x
topology: tpu7x:2x2x1
jax: 0.10.0
libtpu: 0.0.40
codegen_flags: <defaults>
</compile_context>

<pallas_src>
import functools

import jax
import jax.numpy as jnp
from jax.experimental import pallas as pl
from jax.experimental.pallas import tpu as pltpu


def _round_up(v, m):
    return (v + m - 1) // m * m


def _physical_vmem_bytes():
    try:
        info = pltpu.get_tpu_info()
        v = getattr(info, "vmem_capacity_bytes", None)
        if v:
            return int(v)
    except Exception:
        pass
    return 128 * 2**20  # v5e / v6e physical VMEM


def _block_spec(shape, index_map, *, resident=False):
    """BlockSpec; grid-invariant ("resident") blocks request single buffering."""
    if resident:
        try:
            return pl.BlockSpec(shape, index_map, pipeline_mode=pl.Buffered(1))
        except (TypeError, AttributeError):
            pass  # older jax without pipeline_mode: fall back to default buffering
    return pl.BlockSpec(shape, index_map)


def _vmem_limit_bytes(tn, tk, h_p, d_out_p, k_tiles, phys_vmem):
    cap = phys_vmem * 3 // 4                 # headroom for Mosaic internal scratch
    x_tiles = 2 * tn * tk * 2                # double-buffered bf16 input tile
    w1_bytes = (1 if k_tiles == 1 else 2) * tk * h_p * 2
    w2_bytes = h_p * d_out_p * 2             # single-buffered (Buffered(1))
    vec_bytes = (2 * h_p + d_out_p) * 4      # scale, shift, bias rows
    out_tiles = 2 * tn * d_out_p * 4         # double-buffered f32 output tile
    acc_bytes = tn * h_p * 4                 # f32 accumulator scratch
    live = tn * h_p * 4 + tn * d_out_p * 4   # h / out intermediates (regalloc slack)
    need = (x_tiles + w1_bytes + w2_bytes + vec_bytes + out_tiles + acc_bytes
            + live + 2 * 2**20)
    return int(min(cap, max(32 * 2**20, need)))


def cnn_kernel(x_ref, w1_ref, s1_ref, c1_ref, w2_ref, b2_ref, o_ref, acc_ref):
    # x_ref:  (TN, TK) bf16          w1_ref: (TK, H_p) bf16
    # s1_ref: (1, H_p) f32 BN scale  c1_ref: (1, H_p) f32 folded bias/shift
    # w2_ref: (H_p, D_out_p) bf16    b2_ref: (1, D_out_p) f32
    # o_ref:  (TN, D_out_p) f32      acc_ref: (TN, H_p) f32 scratch
    k = pl.program_id(1)

    @pl.when(k == 0)
    def _():
        acc_ref[...] = jnp.zeros_like(acc_ref)

    acc_ref[...] += jnp.dot(x_ref[...], w1_ref[...],
                            preferred_element_type=jnp.float32)

    @pl.when(k == pl.num_programs(1) - 1)
    def _():
        # Eval-mode BatchNorm as f32 per-column scale/shift, then ReLU.
        h = jnp.maximum(acc_ref[...] * s1_ref[...] + c1_ref[...], 0.0)
        # Dropout(p=0.1) is identity in eval mode.
        # TODO(synk): training-mode dropout / batch-stat BN not implemented.
        out = jnp.dot(h.astype(w2_ref.dtype), w2_ref[...],
                      preferred_element_type=jnp.float32)
        o_ref[...] = (out + b2_ref[...]).astype(o_ref.dtype)


def make_cnn_forward(params, *, block_n=256, k_block=None, eps=1e-5,
                     out_dtype=jnp.float32):
    """Fold/cast/pad the weights once and return a jitted forward(x) function."""
    w1, b1 = params["w1"], params["b1"]
    gamma, beta = params["gamma"], params["beta"]
    run_mean, run_var = params["run_mean"], params["run_var"]
    w2, b2 = params["w2"], params["b2"]

    d_in, h_dim = w1.shape
    d_out = w2.shape[1]
    phys_vmem = _physical_vmem_bytes()

    # Feature dims padded to 128 lanes (MXU-dense tiles, unmasked stores).
    h_p = _round_up(h_dim, 128)
    d_out_p = _round_up(d_out, 128)
    d_in_128 = _round_up(d_in, 128)

    # Keep the whole first-layer weight resident when it fits the budget,
    # otherwise tile the contraction axis (K) so each slab fits.
    weight_budget = int(phys_vmem * 0.35)    # ~22 MiB on v7x, ~45 MiB on v5e/v6e
    if k_block is not None:
        tk = _round_up(k_block, 128)
    elif d_in_128 * h_p * 2 <= weight_budget:
        tk = d_in_128
    else:
        tk = max(128, (weight_budget // (h_p * 2)) // 128 * 128)
    d_in_p = _round_up(d_in_128, tk)
    k_tiles = d_in_p // tk

    bf16 = jnp.bfloat16
    # One-time weight preparation (hoisted out of the per-call path).
    scale = gamma / jnp.sqrt(run_var + eps)
    shift = (b1 - run_mean) * scale + beta
    w1_p = jnp.zeros((d_in_p, h_p), bf16).at[:d_in, :h_dim].set(w1.astype(bf16))
    s1_p = jnp.zeros((1, h_p), jnp.float32).at[0, :h_dim].set(scale)
    c1_p = jnp.zeros((1, h_p), jnp.float32).at[0, :h_dim].set(shift)
    w2_p = jnp.zeros((h_p, d_out_p), bf16).at[:h_dim, :d_out].set(w2.astype(bf16))
    b2_p = jnp.zeros((1, d_out_p), jnp.float32).at[0, :d_out].set(b2)

    @jax.jit
    def forward(x):
        N = x.shape[0]
        # Batch tile: multiple of 16 (bf16 sublane packing). Force >=2 grid steps
        # when the batch allows it so the "parallel" axis feeds both v7x cores.
        n16 = _round_up(max(N, 1), 16)
        tn = min(block_n, n16)
        if n16 >= 32 and n16 // tn < 2:
            tn = _round_up(-(-n16 // 2), 16)
        n_p = _round_up(n16, tn)

        x_p = jnp.zeros((n_p, d_in_p), bf16).at[:N, :d_in].set(x.astype(bf16))

        out_p = pl.pallas_call(
            cnn_kernel,
            out_shape=jax.ShapeDtypeStruct((n_p, d_out_p), out_dtype),
            grid=(n_p // tn, k_tiles),
            in_specs=[
                pl.BlockSpec((tn, tk), lambda i, k: (i, k)),           # x (pipelined)
                _block_spec((tk, h_p), lambda i, k: (k, 0),
                            resident=(k_tiles == 1)),                  # w1 slab
                _block_spec((1, h_p), lambda i, k: (0, 0), resident=True),       # BN scale
                _block_spec((1, h_p), lambda i, k: (0, 0), resident=True),       # shift
                _block_spec((h_p, d_out_p), lambda i, k: (0, 0), resident=True),  # w2
                _block_spec((1, d_out_p), lambda i, k: (0, 0), resident=True),    # b2
            ],
            out_specs=pl.BlockSpec((tn, d_out_p), lambda i, k: (i, 0)),
            scratch_shapes=[pltpu.VMEM((tn, h_p), jnp.float32)],
            compiler_params=pltpu.CompilerParams(
                dimension_semantics=("parallel", "arbitrary"),
                vmem_limit_bytes=_vmem_limit_bytes(tn, tk, h_p, d_out_p,
                                                   k_tiles, phys_vmem),
            ),
        )(x_p, w1_p, s1_p, c1_p, w2_p, b2_p)

        return out_p[:N, :d_out]

    return forward


def init_params(key, input_dim, hidden_dim, output_dim):
    k1, k2, k3, k4 = jax.random.split(key, 4)
    # Conv1d(kernel_size=1) weight is (out_ch, in_ch, 1); stored pre-transposed
    # as (in_ch, out_ch) for the matmul form.
    bound1 = 1.0 / jnp.sqrt(input_dim)
    bound2 = 1.0 / jnp.sqrt(hidden_dim)
    return {
        "w1": jax.random.uniform(k1, (input_dim, hidden_dim), jnp.float32, -bound1, bound1),
        "b1": jax.random.uniform(k2, (hidden_dim,), jnp.float32, -bound1, bound1),
        "gamma": jnp.ones((hidden_dim,), jnp.float32),
        "beta": jnp.zeros((hidden_dim,), jnp.float32),
        "run_mean": jnp.zeros((hidden_dim,), jnp.float32),
        "run_var": jnp.ones((hidden_dim,), jnp.float32),
        "w2": jax.random.uniform(k3, (hidden_dim, output_dim), jnp.float32, -bound2, bound2),
        "b2": jax.random.uniform(k4, (output_dim,), jnp.float32, -bound2, bound2),
    }


def cnn_reference(x, params, eps=1e-5):
    hp = jax.lax.Precision.HIGHEST
    h = jnp.dot(x, params["w1"], precision=hp) + params["b1"]
    h = (h - params["run_mean"]) / jnp.sqrt(params["run_var"] + eps)
    h = h * params["gamma"] + params["beta"]
    h = jnp.maximum(h, 0.0)
    return jnp.dot(h, params["w2"], precision=hp) + params["b2"]


if __name__ == "__main__":
    key = jax.random.PRNGKey(0)
    k1, k2, k3, k4 = jax.random.split(key, 4)

    # Case 1: small dims, single step on both grid axes.
    batch, input_dim, hidden_dim, output_dim = 8, 16, 32, 4
    x = jax.random.normal(k1, (batch, input_dim), jnp.float32)
    params = init_params(k2, input_dim, hidden_dim, output_dim)
    fwd = make_cnn_forward(params)
    out = jax.block_until_ready(fwd(x))
    ref = cnn_reference(x, params)
    assert out.shape == (batch, output_dim)
    assert jnp.allclose(out, ref, atol=5e-2, rtol=5e-2), \
        float(jnp.max(jnp.abs(out - ref)))

    # Case 2: non-128-multiple dims, multi-tile batch grid, forced K tiling
    # (exercises padding, accumulator init/finalize and pipelined x tiles).
    batch, input_dim, hidden_dim, output_dim = 40, 200, 130, 70
    x2 = jax.random.normal(k3, (batch, input_dim), jnp.float32)
    params2 = init_params(k4, input_dim, hidden_dim, output_dim)
    fwd2 = make_cnn_forward(params2, k_block=128)
    out2 = jax.block_until_ready(fwd2(x2))
    ref2 = cnn_reference(x2, params2)
    assert out2.shape == (batch, output_dim)
    assert jnp.allclose(out2, ref2, atol=5e-2, rtol=5e-2), \
        float(jnp.max(jnp.abs(out2 - ref2)))

    print("KERNEL_OK")
</pallas_src>

<mosaic_0001>
module attributes {stable_mosaic.version = 11 : i64} {
  func.func @cnn_kernel(%arg0: i32, %arg1: i32, %arg2: memref<16x128xbf16, #tpu.memory_space<vmem>>, %arg3: memref<128x128xbf16, #tpu.memory_space<vmem>>, %arg4: memref<1x128xf32, #tpu.memory_space<vmem>>, %arg5: memref<1x128xf32, #tpu.memory_space<vmem>>, %arg6: memref<128x128xbf16, #tpu.memory_space<vmem>>, %arg7: memref<1x128xf32, #tpu.memory_space<vmem>>, %arg8: memref<16x128xf32, #tpu.memory_space<vmem>>, %arg9: memref<16x128xf32, #tpu.memory_space<vmem>>) attributes {dimension_semantics = [#tpu.dimension_semantics<parallel>, #tpu.dimension_semantics<arbitrary>], iteration_bounds = array<i64: 1, 1>, scalar_prefetch = 0 : i64, scratch_operands = 1 : i64, tpu.core_type = #tpu.core_type<tc>, window_params = [{transform_indices = @transform_0, window_bounds = array<i64: 16, 128>}, {pipeline_mode = #tpu.pipeline_mode<synchronous>, transform_indices = @transform_1, window_bounds = array<i64: 128, 128>}, {pipeline_mode = #tpu.pipeline_mode<synchronous>, transform_indices = @transform_2, window_bounds = array<i64: 1, 128>}, {pipeline_mode = #tpu.pipeline_mode<synchronous>, transform_indices = @transform_3, window_bounds = array<i64: 1, 128>}, {pipeline_mode = #tpu.pipeline_mode<synchronous>, transform_indices = @transform_4, window_bounds = array<i64: 128, 128>}, {pipeline_mode = #tpu.pipeline_mode<synchronous>, transform_indices = @transform_5, window_bounds = array<i64: 1, 128>}, {transform_indices = @transform_6, window_bounds = array<i64: 16, 128>}]} {
    %c0_i32 = arith.constant 0 : i32
    %0 = arith.cmpi eq, %arg1, %c0_i32 : i32
    %1 = arith.extui %0 : i1 to i32
    %c0_i32_0 = arith.constant 0 : i32
    %2 = arith.cmpi ne, %1, %c0_i32_0 : i32
    scf.if %2 {
      %cst_10 = arith.constant 0.000000e+00 : f32
      %12 = vector.broadcast %cst_10 : f32 to vector<16x128xf32>
      %c0_11 = arith.constant 0 : index
      %c0_12 = arith.constant 0 : index
      %13 = vector.load %arg9[%c0_11, %c0_12] : memref<16x128xf32, #tpu.memory_space<vmem>>, vector<16x128xf32>
      tpu.vector_store %arg9[%c0_11, %c0_12], %12 {strides = array<i32>} : memref<16x128xf32, #tpu.memory_space<vmem>>, vector<16x128xf32>,
    } else {
    }
    %c0 = arith.constant 0 : index
    %c0_1 = arith.constant 0 : index
    %3 = vector.load %arg9[%c0, %c0_1] : memref<16x128xf32, #tpu.memory_space<vmem>>, vector<16x128xf32>
    %c0_2 = arith.constant 0 : index
    %c0_3 = arith.constant 0 : index
    %4 = vector.load %arg2[%c0_2, %c0_3] : memref<16x128xbf16, #tpu.memory_space<vmem>>, vector<16x128xbf16>
    %c0_4 = arith.constant 0 : index
    %c0_5 = arith.constant 0 : index
    %5 = vector.load %arg3[%c0_4, %c0_5] : memref<128x128xbf16, #tpu.memory_space<vmem>>, vector<128x128xbf16>
    %cst = arith.constant dense<0.000000e+00> : vector<16x128xf32>
    %6 = tpu.matmul %4, %5, %cst {dimension_numbers = #tpu.dot_dimension_numbers<[1], [0], [0], [1], [0, 0, 1, 1], [], []>} : vector<16x128xbf16>, vector<128x128xbf16>, vector<16x128xf32> -> vector<16x128xf32>
    %7 = arith.addf %3, %6 : vector<16x128xf32>
    %c0_6 = arith.constant 0 : index
    %c0_7 = arith.constant 0 : index
    %8 = vector.load %arg9[%c0_6, %c0_7] : memref<16x128xf32, #tpu.memory_space<vmem>>, vector<16x128xf32>
    tpu.vector_store %arg9[%c0_6, %c0_7], %7 {strides = array<i32>} : memref<16x128xf32, #tpu.memory_space<vmem>>, vector<16x128xf32>,
    %c0_i32_8 = arith.constant 0 : i32
    %9 = arith.cmpi eq, %arg1, %c0_i32_8 : i32
    %10 = arith.extui %9 : i1 to i32
    %c0_i32_9 = arith.constant 0 : i32
    %11 = arith.cmpi ne, %10, %c0_i32_9 : i32
    scf.if %11 {
      %c0_10 = arith.constant 0 : index
      %c0_11 = arith.constant 0 : index
      %12 = vector.load %arg9[%c0_10, %c0_11] : memref<16x128xf32, #tpu.memory_space<vmem>>, vector<16x128xf32>
      %c0_12 = arith.constant 0 : index
      %c0_13 = arith.constant 0 : index
      %13 = vector.load %arg4[%c0_12, %c0_13] : memref<1x128xf32, #tpu.memory_space<vmem>>, vector<1x128xf32>
      %14 = vector.broadcast %13 : vector<1x128xf32> to vector<16x128xf32>
      %15 = arith.mulf %12, %14 : vector<16x128xf32>
      %c0_14 = arith.constant 0 : index
      %c0_15 = arith.constant 0 : index
      %16 = vector.load %arg5[%c0_14, %c0_15] : memref<1x128xf32, #tpu.memory_space<vmem>>, vector<1x128xf32>
      %17 = vector.broadcast %16 : vector<1x128xf32> to vector<16x128xf32>
      %18 = arith.addf %15, %17 : vector<16x128xf32>
      %cst_16 = arith.constant 0.000000e+00 : f32
      %19 = vector.broadcast %cst_16 : f32 to vector<16x128xf32>
      %20 = arith.maximumf %18, %19 : vector<16x128xf32>
      %21 = arith.truncf %20 : vector<16x128xf32> to vector<16x128xbf16>
      %c0_17 = arith.constant 0 : index
      %c0_18 = arith.constant 0 : index
      %22 = vector.load %arg6[%c0_17, %c0_18] : memref<128x128xbf16, #tpu.memory_space<vmem>>, vector<128x128xbf16>
      %cst_19 = arith.constant dense<0.000000e+00> : vector<16x128xf32>
      %23 = tpu.matmul %21, %22, %cst_19 {dimension_numbers = #tpu.dot_dimension_numbers<[1], [0], [0], [1], [0, 0, 1, 1], [], []>} : vector<16x128xbf16>, vector<128x128xbf16>, vector<16x128xf32> -> vector<16x128xf32>
      %c0_20 = arith.constant 0 : index
      %c0_21 = arith.constant 0 : index
      %24 = vector.load %arg7[%c0_20, %c0_21] : memref<1x128xf32, #tpu.memory_space<vmem>>, vector<1x128xf32>
      %25 = vector.broadcast %24 : vector<1x128xf32> to vector<16x128xf32>
      %26 = arith.addf %23, %25 : vector<16x128xf32>
      %c0_22 = arith.constant 0 : index
      %c0_23 = arith.constant 0 : index
      %27 = vector.load %arg8[%c0_22, %c0_23] : memref<16x128xf32, #tpu.memory_space<vmem>>, vector<16x128xf32>
      tpu.vector_store %arg8[%c0_22, %c0_23], %26 {strides = array<i32>} : memref<16x128xf32, #tpu.memory_space<vmem>>, vector<16x128xf32>,
    } else {
    }
    return
  }
  func.func @transform_0(%arg0: i32, %arg1: i32) -> (i32, i32) {
    %c0_i32 = arith.constant 0 : i32
    return %arg0, %arg1 : i32, i32
  }
  func.func @transform_1(%arg0: i32, %arg1: i32) -> (i32, i32) {
    %c0_i32 = arith.constant 0 : i32
    %c0_i32_0 = arith.constant 0 : i32
    return %arg1, %c0_i32 : i32, i32
  }
  func.func @transform_2(%arg0: i32, %arg1: i32) -> (i32, i32) {
    %c0_i32 = arith.constant 0 : i32
    %c0_i32_0 = arith.constant 0 : i32
    %c0_i32_1 = arith.constant 0 : i32
    return %c0_i32, %c0_i32_0 : i32, i32
  }
  func.func @transform_3(%arg0: i32, %arg1: i32) -> (i32, i32) {
    %c0_i32 = arith.constant 0 : i32
    %c0_i32_0 = arith.constant 0 : i32
    %c0_i32_1 = arith.constant 0 : i32
    return %c0_i32, %c0_i32_0 : i32, i32
  }
  func.func @transform_4(%arg0: i32, %arg1: i32) -> (i32, i32) {
    %c0_i32 = arith.constant 0 : i32
    %c0_i32_0 = arith.constant 0 : i32
    %c0_i32_1 = arith.constant 0 : i32
    return %c0_i32, %c0_i32_0 : i32, i32
  }
  func.func @transform_5(%arg0: i32, %arg1: i32) -> (i32, i32) {
    %c0_i32 = arith.constant 0 : i32
    %c0_i32_0 = arith.constant 0 : i32
    %c0_i32_1 = arith.constant 0 : i32
    return %c0_i32, %c0_i32_0 : i32, i32
  }
  func.func @transform_6(%arg0: i32, %arg1: i32) -> (i32, i32) {
    %c0_i32 = arith.constant 0 : i32
    %c0_i32_0 = arith.constant 0 : i32
    return %arg0, %c0_i32 : i32, i32
  }
}

</mosaic_0001>

<llo_original>
// kernel: forward.1
$region0: #{forward.1}
  #allocation0 [shape = 'u32[]', space=smem, size = 0x4, offset = 0x4, fixed_abs, tag = 'smem constant byte address 0x4 - core index']
  #allocation1 [shape = 'u32[144,128]{1,0:T(1,128)}', space=vmem, size = 0x12000, scoped, tag = 'internal scratch']
  #allocation2 [shape = 'f32[16,128]{1,0:T(8,128)}', space=vmem, size = 0x2000, scoped, tag = 'scratch operand']
  %s0 = inlined_call_operand.vmem [shape: bf16[16,128], index: 0, kind: input, shape index: {}]
  %s1 = inlined_call_operand.hbm [shape: bf16[128,128], index: 1, kind: input, shape index: {}]
  %s2 = inlined_call_operand.vmem [shape: f32[1,128], index: 2, kind: input, shape index: {}]
  %s3 = inlined_call_operand.vmem [shape: f32[1,128], index: 3, kind: input, shape index: {}]
  %s4 = inlined_call_operand.hbm [shape: bf16[128,128], index: 4, kind: input, shape index: {}]
  %s5 = inlined_call_operand.vmem [shape: f32[1,128], index: 5, kind: input, shape index: {}]
  %s6 = inlined_call_operand.vmem [shape: f32[16,128], index: 6, kind: output, shape index: {}]
  %s7 = sld [smem:[#allocation0]]
  $region50: #{forward.1} parent=0
    _
  %s9 = ssub.s32 1, %s7
  %s10 = scalar_select 0, %s9, %s7
  $region1: #{forward.1} parent=0
    #allocation3 [shape = 'u8[32768]{0}', space=vmem, size = 0x8000, scoped, tag = 'input window, operand 1, single buffered']
    #allocation4 [shape = 's32[1]{0}', space=sflag, size = 0x4, scoped, tag = 'scoped memory for forward.1']
    #allocation5 [shape = 'u8[32768]{0}', space=vmem, size = 0x8000, scoped, tag = 'input window, operand 4, single buffered']
    #allocation6 [shape = 's32[1]{0}', space=sflag, size = 0x4, scoped, tag = 'scoped memory for forward.1']
    %11 = vsyncpa [#allocation4], 0
    %12 = vsyncpa [#allocation6], 0
    // Predicated region
    $region2: #{forward.1} parent=1 // pred_check
      _
    $region3: #{forward.1} parent=1 // pred_check_branch
      %14 = sbr.rel (0) target = $region5
    $region4: #{forward.1} parent=1 // pred_region
      _
    $region5: #{forward.1} parent=1 // pred_fallthru
      _
    // Predicated region
    $region6: #{forward.1} parent=1 // pred_check
      _
    $region7: #{forward.1} parent=1 // pred_check_branch
      %16 = sbr.rel (0) target = $region9
    $region8: #{forward.1} parent=1 // pred_region
      %s18 = ssub.s32 1024, 1024
      %19 = vsyncadd [#allocation4], %s18
      %s20 = sshll.u32 [#allocation3], 4
      %s21 = int_to_ptr.vmem [resolvable:$true] %s20
      %26 = dma.hbm_to_vmem [thread:$0]  %s1, 1024, %s21, [#allocation4], 64, 64, 4
    $region9: #{forward.1} parent=1 // pred_fallthru
      _
    // Predicated region
    $region10: #{forward.1} parent=1 // pred_check
      _
    $region11: #{forward.1} parent=1 // pred_check_branch
      %28 = sbr.rel (0) target = $region13
    $region12: #{forward.1} parent=1 // pred_region
      _
    $region13: #{forward.1} parent=1 // pred_fallthru
      _
    // Predicated region
    $region14: #{forward.1} parent=1 // pred_check
      _
    $region15: #{forward.1} parent=1 // pred_check_branch
      %30 = sbr.rel (0) target = $region17
    $region16: #{forward.1} parent=1 // pred_region
      _
    $region17: #{forward.1} parent=1 // pred_fallthru
      _
    // Predicated region
    $region18: #{forward.1} parent=1 // pred_check
      _
    $region19: #{forward.1} parent=1 // pred_check_branch
      %32 = sbr.rel (0) target = $region21
    $region20: #{forward.1} parent=1 // pred_region
      %s34 = ssub.s32 1024, 1024
      %35 = vsyncadd [#allocation6], %s34
      %s36 = sshll.u32 [#allocation5], 4
      %s37 = int_to_ptr.vmem [resolvable:$true] %s36
      %42 = dma.hbm_to_vmem [thread:$0]  %s4, 1024, %s37, [#allocation6], 64, 64, 4
    $region21: #{forward.1} parent=1 // pred_fallthru
      _
    // Predicated region
    $region22: #{forward.1} parent=1 // pred_check
      _
    $region23: #{forward.1} parent=1 // pred_check_branch
      %44 = sbr.rel (0) target = $region25
    $region24: #{forward.1} parent=1 // pred_region
      _
    $region25: #{forward.1} parent=1 // pred_fallthru
      _
    // Predicated region
    $region26: #{forward.1} parent=1 // pred_check
      _
    $region27: #{forward.1} parent=1 // pred_check_branch
      %46 = sbr.rel (0) target = $region29
    $region28: #{forward.1} parent=1 // pred_region
      %47 = dma.done [#allocation4], 1024
    $region29: #{forward.1} parent=1 // pred_fallthru
      _
    // Predicated region
    $region30: #{forward.1} parent=1 // pred_check
      _
    $region31: #{forward.1} parent=1 // pred_check_branch
      %49 = sbr.rel (0) target = $region33
    $region32: #{forward.1} parent=1 // pred_region
      %50 = dma.done [#allocation6], 1024
    $region33: #{forward.1} parent=1 // pred_fallthru
      _
    %p52 = scmp.eq.s32.totalorder 0, 0
    // Predicated region
    $region34: #{forward.1} parent=1 // pred_check
      %p53 = pneg %p52
    $region35: #{forward.1} parent=1 // pred_check_branch
      %55 = sbr.rel (%p53) target = $region37
    $region36: #{forward.1} parent=1 // pred_region
      %56 = vst [vmem:[#allocation2] sm:$0xff] 0.0
      %57 = vst [vmem:[#allocation2 + $0x8] sm:$0xff] 0.0
    $region37: #{forward.1} parent=1 // pred_fallthru
      _
    %v58 = vld [vmem:[#allocation2] sm:$0xff]
    %v59 = vld [vmem:[#allocation2 + $0x8] sm:$0xff]
    %v60 = vld [vmem:[%s0] sm:$0xf]
    %v61 = vld [vmem:[%s0 + $0x4] sm:$0xf]
    %v62 = vld [vmem:[#allocation3] sm:$0xf]
    %v63 = vld [vmem:[#allocation3 + $0x4] sm:$0xf]
    %v64 = vld [vmem:[#allocation3 + $0x8] sm:$0xf]
    %v65 = vld [vmem:[#allocation3 + $0xc] sm:$0xf]
    %v66 = vld [vmem:[#allocation3 + $0x10] sm:$0xf]
    %v67 = vld [vmem:[#allocation3 + $0x14] sm:$0xf]
    %v68 = vld [vmem:[#allocation3 + $0x18] sm:$0xf]
    %v69 = vld [vmem:[#allocation3 + $0x1c] sm:$0xf]
    %v70 = vld [vmem:[#allocation3 + $0x20] sm:$0xf]
    %v71 = vld [vmem:[#allocation3 + $0x24] sm:$0xf]
    %v72 = vld [vmem:[#allocation3 + $0x28] sm:$0xf]
    %v73 = vld [vmem:[#allocation3 + $0x2c] sm:$0xf]
    %v74 = vld [vmem:[#allocation3 + $0x30] sm:$0xf]
    %v75 = vld [vmem:[#allocation3 + $0x34] sm:$0xf]
    %v76 = vld [vmem:[#allocation3 + $0x38] sm:$0xf]
    %v77 = vld [vmem:[#allocation3 + $0x3c] sm:$0xf]
    %v80 = vunpack.c.l.b16 %v60
    %v81 = vunpack.c.l.b16 %v61
    %v82 = vpack.c.b16 %v81, %v80
    %v100 = vunpack.c.l.b16 %v62
    %v101 = vunpack.c.l.b16 %v63
    %v102 = vunpack.c.l.b16 %v64
    %v103 = vunpack.c.l.b16 %v65
    %v104 = vunpack.c.l.b16 %v66
    %v105 = vunpack.c.l.b16 %v67
    %v106 = vunpack.c.l.b16 %v68
    %v107 = vunpack.c.l.b16 %v69
    %v108 = vunpack.c.l.b16 %v70
    %v109 = vunpack.c.l.b16 %v71
    %v110 = vunpack.c.l.b16 %v72
    %v111 = vunpack.c.l.b16 %v73
    %v112 = vunpack.c.l.b16 %v74
    %v113 = vunpack.c.l.b16 %v75
    %v114 = vunpack.c.l.b16 %v76
    %v115 = vunpack.c.l.b16 %v77
    %v116 = vpack.c.b16 %v101, %v100
    %v117 = vpack.c.b16 %v103, %v102
    %v118 = vpack.c.b16 %v105, %v104
    %v119 = vpack.c.b16 %v107, %v106
    %v120 = vpack.c.b16 %v109, %v108
    %v121 = vpack.c.b16 %v111, %v110
    %v122 = vpack.c.b16 %v113, %v112
    %v123 = vpack.c.b16 %v115, %v114
    %132 = vmatprep.subr.bf16.mxu0 0
    %133 = vmatpush1.bf16.msra.mxu0 %v116
    %134 = vmatprep.subr.bf16.mxu0 0
    %135 = vmatpush1.bf16.msra.mxu0 %v117
    %136 = vmatprep.subr.bf16.mxu0 0
    %137 = vmatpush1.bf16.msra.mxu0 %v118
    %138 = vmatprep.subr.bf16.mxu0 0
    %139 = vmatpush1.bf16.msra.mxu0 %v119
    %140 = vmatprep.subr.bf16.mxu0 0
    %141 = vmatpush1.bf16.msra.mxu0 %v120
    %142 = vmatprep.subr.bf16.mxu0 0
    %143 = vmatpush1.bf16.msra.mxu0 %v121
    %144 = vmatprep.subr.bf16.mxu0 0
    %145 = vmatpush1.bf16.msra.mxu0 %v122
    %146 = vmatprep.subr.bf16.mxu0 0
    %147 = vmatpush1.bf16.msra.mxu0 %v123
    %148 = vmatprep.subr.bf16.mxu0 0
    %149 = vmatpush1.bf16.msra.mxu0 0
    %150 = vmatprep.subr.bf16.mxu0 0
    %151 = vmatpush1.bf16.msra.mxu0 0
    %152 = vmatprep.subr.bf16.mxu0 0
    %153 = vmatpush1.bf16.msra.mxu0 0
    %154 = vmatprep.subr.bf16.mxu0 0
    %155 = vmatpush1.bf16.msra.mxu0 0
    %156 = vmatprep.subr.bf16.mxu0 0
    %157 = vmatpush1.bf16.msra.mxu0 0
    %158 = vmatprep.subr.bf16.mxu0 0
    %159 = vmatpush1.bf16.msra.mxu0 0
    %160 = vmatprep.subr.bf16.mxu0 0
    %161 = vmatpush1.bf16.msra.mxu0 0
    %162 = vmatprep.subr.bf16.mxu0 0
    %163 = vmatpush1.bf16.msra.mxu0 0
    %164 = vmatprep.mubr.bf16.mxu0 0
    %165 = vmatmul.mubr.bf16.gmra.mrb[0].mxu0 %v82
    %v166 = vpop.f32.mrb[0].mxu0
    %v167 = vadd.f32 0.0, %v166
    %v168 = vpop.f32.mrb[0].mxu0
    %v169 = vpop.f32.mrb[0].mxu0
    %v170 = vadd.f32 0.0, %v169
    %v171 = vpop.f32.mrb[0].mxu0
    %172 = vdwg.mxu0
    %v173 = vadd.f32 %v58, %v167
    %v174 = vadd.f32 %v59, %v170
    %175 = vst [vmem:[#allocation2] sm:$0xff] %v173
    %176 = vst [vmem:[#allocation2 + $0x8] sm:$0xff] %v174
    // Predicated region
    $region38: #{forward.1} parent=1 // pred_check
      %p177 = pneg %p52
    $region39: #{forward.1} parent=1 // pred_check_branch
      %179 = sbr.rel (%p177) target = $region41
    $region40: #{forward.1} parent=1 // pred_region
      %v180 = vld [vmem:[#allocation2] sm:$0xff]
      %v181 = vld [vmem:[#allocation2 + $0x8] sm:$0xff]
      %v182 = vld [vmem:[%s2] sm:$0x1]
      %v184 = vlaneseq
      %v185 = vshrl.u32 %v184, 7
      %v186 = vsub.s32 0, %v185
      %v187 = vrot.slane %v182, %v186
      %v189 = vmul.f32 %v180, %v187
      %v190 = vmul.f32 %v181, %v187
      %v191 = vld [vmem:[%s3] sm:$0x1]
      %v193 = vlaneseq
      %v194 = vshrl.u32 %v193, 7
      %v195 = vsub.s32 0, %v194
      %v196 = vrot.slane %v191, %v195
      %v198 = vadd.f32 %v189, %v196
      %v199 = vadd.f32 %v190, %v196
      %v200 = vmax.f32 %v198, 0.0
      %v201 = vmax.f32 %v199, 0.0
      %v202 = vpack.c.bf16 %v201, %v200
      %v203 = vld [vmem:[#allocation5] sm:$0xf]
      %v204 = vld [vmem:[#allocation5 + $0x4] sm:$0xf]
      %v205 = vld [vmem:[#allocation5 + $0x8] sm:$0xf]
      %v206 = vld [vmem:[#allocation5 + $0xc] sm:$0xf]
      %v207 = vld [vmem:[#allocation5 + $0x10] sm:$0xf]
      %v208 = vld [vmem:[#allocation5 + $0x14] sm:$0xf]
      %v209 = vld [vmem:[#allocation5 + $0x18] sm:$0xf]
      %v210 = vld [vmem:[#allocation5 + $0x1c] sm:$0xf]
      %v211 = vld [vmem:[#allocation5 + $0x20] sm:$0xf]
      %v212 = vld [vmem:[#allocation5 + $0x24] sm:$0xf]
      %v213 = vld [vmem:[#allocation5 + $0x28] sm:$0xf]
      %v214 = vld [vmem:[#allocation5 + $0x2c] sm:$0xf]
      %v215 = vld [vmem:[#allocation5 + $0x30] sm:$0xf]
      %v216 = vld [vmem:[#allocation5 + $0x34] sm:$0xf]
      %v217 = vld [vmem:[#allocation5 + $0x38] sm:$0xf]
      %v218 = vld [vmem:[#allocation5 + $0x3c] sm:$0xf]
      %v219 = vld [vmem:[%s5] sm:$0x1]
      %v221 = vlaneseq
      %v222 = vshrl.u32 %v221, 7
      %v223 = vsub.s32 0, %v222
      %v224 = vrot.slane %v219, %v223
      %v242 = vunpack.c.l.b16 %v203
      %v243 = vunpack.c.l.b16 %v204
      %v244 = vunpack.c.l.b16 %v205
      %v245 = vunpack.c.l.b16 %v206
      %v246 = vunpack.c.l.b16 %v207
      %v247 = vunpack.c.l.b16 %v208
      %v248 = vunpack.c.l.b16 %v209
      %v249 = vunpack.c.l.b16 %v210
      %v250 = vunpack.c.l.b16 %v211
      %v251 = vunpack.c.l.b16 %v212
      %v252 = vunpack.c.l.b16 %v213
      %v253 = vunpack.c.l.b16 %v214
      %v254 = vunpack.c.l.b16 %v215
      %v255 = vunpack.c.l.b16 %v216
      %v256 = vunpack.c.l.b16 %v217
      %v257 = vunpack.c.l.b16 %v218
      %v258 = vpack.c.b16 %v243, %v242
      %v259 = vpack.c.b16 %v245, %v244
      %v260 = vpack.c.b16 %v247, %v246
      %v261 = vpack.c.b16 %v249, %v248
      %v262 = vpack.c.b16 %v251, %v250
      %v263 = vpack.c.b16 %v253, %v252
      %v264 = vpack.c.b16 %v255, %v254
      %v265 = vpack.c.b16 %v257, %v256
      %274 = vmatprep.subr.bf16.mxu0 0
      %275 = vmatpush1.bf16.msra.mxu0 %v258
      %276 = vmatprep.subr.bf16.mxu0 0
      %277 = vmatpush1.bf16.msra.mxu0 %v259
      %278 = vmatprep.subr.bf16.mxu0 0
      %279 = vmatpush1.bf16.msra.mxu0 %v260
      %280 = vmatprep.subr.bf16.mxu0 0
      %281 = vmatpush1.bf16.msra.mxu0 %v261
      %282 = vmatprep.subr.bf16.mxu0 0
      %283 = vmatpush1.bf16.msra.mxu0 %v262
      %284 = vmatprep.subr.bf16.mxu0 0
      %285 = vmatpush1.bf16.msra.mxu0 %v263
      %286 = vmatprep.subr.bf16.mxu0 0
      %287 = vmatpush1.bf16.msra.mxu0 %v264
      %288 = vmatprep.subr.bf16.mxu0 0
      %289 = vmatpush1.bf16.msra.mxu0 %v265
      %290 = vmatprep.subr.bf16.mxu0 0
      %291 = vmatpush1.bf16.msra.mxu0 0
      %292 = vmatprep.subr.bf16.mxu0 0
      %293 = vmatpush1.bf16.msra.mxu0 0
      %294 = vmatprep.subr.bf16.mxu0 0
      %295 = vmatpush1.bf16.msra.mxu0 0
      %296 = vmatprep.subr.bf16.mxu0 0
      %297 = vmatpush1.bf16.msra.mxu0 0
      %298 = vmatprep.subr.bf16.mxu0 0
      %299 = vmatpush1.bf16.msra.mxu0 0
      %300 = vmatprep.subr.bf16.mxu0 0
      %301 = vmatpush1.bf16.msra.mxu0 0
      %302 = vmatprep.subr.bf16.mxu0 0
      %303 = vmatpush1.bf16.msra.mxu0 0
      %304 = vmatprep.subr.bf16.mxu0 0
      %305 = vmatpush1.bf16.msra.mxu0 0
      %306 = vmatprep.mubr.bf16.mxu0 0
      %307 = vmatmul.mubr.bf16.gmra.mrb[0].mxu0 %v202
      %v308 = vpop.f32.mrb[0].mxu0
      %v309 = vadd.f32 %v224, %v308
      %v310 = vpop.f32.mrb[0].mxu0
      %v311 = vpop.f32.mrb[0].mxu0
      %v312 = vadd.f32 %v224, %v311
      %v313 = vpop.f32.mrb[0].mxu0
      %314 = vdwg.mxu0
      %315 = vst [vmem:[%s6] sm:$0xff] %v309
      %316 = vst [vmem:[%s6 + $0x8] sm:$0xff] %v312
    $region41: #{forward.1} parent=1 // pred_fallthru
      _
    // Predicated region
    $region42: #{forward.1} parent=1 // pred_check
      _
    $region43: #{forward.1} parent=1 // pred_check_branch
      %318 = sbr.rel (0) target = $region45
    $region44: #{forward.1} parent=1 // pred_region
      _
    $region45: #{forward.1} parent=1 // pred_fallthru
      _
    // Predicated region
    $region46: #{forward.1} parent=1 // pred_check
      _
    $region47: #{forward.1} parent=1 // pred_check_branch
      %320 = sbr.rel (0) target = $region49
    $region48: #{forward.1} parent=1 // pred_region
      _
    $region49: #{forward.1} parent=1 // pred_fallthru
      _
    %321 = vsyncpa [#allocation4], 1
    %322 = vsyncpa [#allocation6], 1

</llo_original>
